<compile_context>
chip_gen: v6e
topology: v6e:2x2x1
jax: 0.10.0
libtpu: 0.0.40
codegen_flags: <defaults>
</compile_context>

<pallas_src>
import functools
import math

import numpy as np
import jax
import jax.numpy as jnp
from jax.experimental import pallas as pl
from jax.experimental.pallas import tpu as pltpu


# --------------------------------------------------------------------------- #
# Kernel
# --------------------------------------------------------------------------- #
def _embedding_kernel(x_ref, w_ref, t_ref, q_ref, kv_ref, *, q_cols):
    # x_ref : (TM, R*D)              flattened (b,t) rows, lanes = (r, d) row-major
    # w_ref : (R*D, q_cols+kv_cols)  block-diagonal fused DFT weight [W_q | W_kv]
    # t_ref : (TM, 2)                per-row affine time embeddings [tq | tkv]
    # q_ref : (TM, q_cols)           q slab, lanes = (d, part, k)
    # kv_ref: (TM, kv_cols)          kv slab, lanes = (d, part, m)
    emb = jnp.dot(x_ref[...], w_ref[...], preferred_element_type=jnp.float32)
    t = t_ref[...]
    # kv is sliced from the UNSCALED embedding (never derived from q: the q time
    # embedding can be ~0) and gets its own time scale.
    q_ref[...] = (emb[:, :q_cols] * t[:, 0:1]).astype(q_ref.dtype)
    kv_ref[...] = (emb[:, q_cols:] * t[:, 1:2]).astype(kv_ref.dtype)


# --------------------------------------------------------------------------- #
# Host-side helpers
# --------------------------------------------------------------------------- #
@functools.lru_cache(maxsize=None)
def _fused_dft_weight(R, D, q_modes, kv_modes, dtype_name):
    """Fused block-diagonal DFT weight of shape (R*D, D*2*(q_modes+kv_modes)).

    Column layout: [q slab columns | kv slab columns].  For each slab,
    W[(r, d), (e, part, k)] = eye[d, e] * ( cos(2*pi*k*r/R)  if part == 0
                                           -sin(2*pi*k*r/R)  if part == 1 )
    so with x flattened to (M, R*D) (row-major over (r, d)) the matmul output
    already has the final (d, part, k) lane order -> output reshape is free.
    Cached per (R, D, modes) so it never sits on the kernel's critical path.
    """
    def dft_cols(k_cols):
        r = np.arange(R, dtype=np.float64)[:, None]
        k = np.arange(k_cols, dtype=np.float64)[None, :]
        ang = 2.0 * math.pi * r * k / float(R)
        return np.concatenate([np.cos(ang), -np.sin(ang)], axis=1)   # (R, 2k)

    eye_d = np.eye(D, dtype=np.float64)

    def block_diag(k_cols):
        w = np.einsum('rc,de->rdec', dft_cols(k_cols), eye_d)        # (R,D,D,2k)
        return w.reshape(R * D, D * 2 * k_cols)

    w = np.concatenate([block_diag(q_modes), block_diag(kv_modes)], axis=1)
    return jnp.asarray(w.astype(np.float32), dtype=jnp.dtype(dtype_name))


def _pick_row_tile(m_rows, bytes_per_row, weight_bytes, vmem_budget=48 << 20):
    """Row-tile: ~8 pipelined grid steps for big M, VMEM-capped, multiple of 8."""
    avail = max(vmem_budget - 2 * weight_bytes, vmem_budget // 8)
    cap = max(8, (avail // max(2 * bytes_per_row, 1)) // 8 * 8)
    # Target >= 8 grid steps (engages DMA double-buffering and v7x megacore
    # sharding) while keeping tiles fat (>=256 rows) so each step is one big
    # MXU matmul and the ~0.35us/step grid overhead stays negligible.
    target = max(256, ((m_rows + 7) // 8 + 7) // 8 * 8)
    tm = min(target, cap, 1024)
    if tm >= m_rows:
        return m_rows          # full extent is always a legal block dim
    return max(8, (tm // 8) * 8)


# --------------------------------------------------------------------------- #
# Forward
# --------------------------------------------------------------------------- #
def embedding_forward(x, kv_time, q_time, modes_in, time_w, time_b, *,
                      compute_dtype=jnp.float32, out_dtype=jnp.float32):
    """x: (B, T, R, D); kv_time, q_time: (B, T). Returns (q, kv, kv).

    q : (B, T, D, 2, R//2)      kv : (B, T, D, 2, modes_in)
    compute_dtype=jnp.bfloat16 enables the bandwidth-optimized v6e/v7x path
    (f32 MXU accumulation is kept either way).
    """
    B, T, R, D = x.shape
    K = R // 2
    M = B * T
    RD = R * D
    q_cols = D * 2 * K
    kv_cols = D * 2 * modes_in

    compute_dtype = jnp.dtype(compute_dtype)
    out_dtype = jnp.dtype(out_dtype)

    # Free reshape (contiguous collapse) — no host-side HBM permute of x.
    x2d = x.reshape(M, RD).astype(compute_dtype)

    # nn.Linear(1, 1) on the time scalars (scalar affine), merged into a single
    # (M, 2) column pair so one small block is DMA'd per tile.
    tq = (time_w * q_time.astype(jnp.float32) + time_b).reshape(M)
    tkv = (time_w * kv_time.astype(jnp.float32) + time_b).reshape(M)
    t_rows = jnp.stack([tq, tkv], axis=-1)                  # (M, 2)

    w = _fused_dft_weight(R, D, K, modes_in, compute_dtype.name)  # (RD, q+kv cols)

    # VMEM-budgeted tile choice + explicit scoped-VMEM limit.
    bytes_per_row = (RD * compute_dtype.itemsize
                     + (q_cols + kv_cols) * out_dtype.itemsize
                     + 128 * 4)                             # (TM,2) pads to 128 lanes
    weight_bytes = RD * (q_cols + kv_cols) * compute_dtype.itemsize
    TM = _pick_row_tile(M, bytes_per_row, weight_bytes)
    n_steps = pl.cdiv(M, TM)
    vmem_est = 2 * TM * bytes_per_row + 2 * weight_bytes
    vmem_limit = int(min(max(1.25 * vmem_est + (2 << 20), 16 << 20), 48 << 20))

    kernel = functools.partial(_embedding_kernel, q_cols=q_cols)

    def run(single_buffer_weight):
        w_kwargs = {}
        if single_buffer_weight and hasattr(pl, "Buffered"):
            # Constant index_map -> the weight is never re-DMA'd; Buffered(1)
            # also drops the second (useless) VMEM copy of the weight.
            w_kwargs["pipeline_mode"] = pl.Buffered(1)
        return pl.pallas_call(
            kernel,
            grid=(n_steps,),
            in_specs=[
                pl.BlockSpec((TM, RD), lambda i: (i, 0)),                  # x rows
                pl.BlockSpec((RD, q_cols + kv_cols), lambda i: (0, 0),     # fused W
                             **w_kwargs),
                pl.BlockSpec((TM, 2), lambda i: (i, 0)),                   # [tq|tkv]
            ],
            out_specs=[
                pl.BlockSpec((TM, q_cols), lambda i: (i, 0)),              # q slab
                pl.BlockSpec((TM, kv_cols), lambda i: (i, 0)),             # kv slab
            ],
            out_shape=[
                jax.ShapeDtypeStruct((M, q_cols), out_dtype),
                jax.ShapeDtypeStruct((M, kv_cols), out_dtype),
            ],
            compiler_params=pltpu.CompilerParams(
                dimension_semantics=("parallel",),
                vmem_limit_bytes=vmem_limit),
        )(x2d, w, t_rows)

    try:
        q_slab, kv_slab = run(True)
    except Exception:
        # pipeline_mode=pl.Buffered(1) unsupported by this jax build; default
        # double-buffered weight spec is still correct (just 2x weight VMEM).
        q_slab, kv_slab = run(False)

    # Free reshapes: slabs are already in (d, part, k) lane order.
    q = q_slab.reshape(B, T, D, 2, K)
    kv = kv_slab.reshape(B, T, D, 2, modes_in)

    # TODO(synk): self.frequency_embedding / self.src_function are side
    # attributes in the reference forward that are never returned; not
    # materialized here.
    return q, kv, kv


# --------------------------------------------------------------------------- #
# Demo / validation
# --------------------------------------------------------------------------- #
if __name__ == "__main__":
    key = jax.random.PRNGKey(0)
    k1, k2, k3 = jax.random.split(key, 3)

    B, T, R, D = 2, 2, 16, 4
    modes_in = 4
    K = R // 2

    x = jax.random.normal(k1, (B, T, R, D), dtype=jnp.float32)
    kv_time = jax.random.uniform(k2, (B, T), dtype=jnp.float32)
    q_time = jax.random.uniform(k3, (B, T), dtype=jnp.float32)

    # Deterministic nn.Linear(1, 1) parameters for time_embedding.
    time_w = jnp.float32(0.7)
    time_b = jnp.float32(-0.3)

    q, kv, kv2 = embedding_forward(x, kv_time, q_time, modes_in, time_w, time_b)
    jax.block_until_ready((q, kv, kv2))

    # Pure-JAX reference (jnp.fft) to validate the fused DFT-matmul kernel.
    xp = jnp.transpose(x, (0, 1, 3, 2))                       # (B, T, D, R)
    fft = jnp.fft.fft(xp, axis=-1)[..., :K]
    real = jnp.real(fft)[:, :, :, None, :]
    imag = jnp.imag(fft)[:, :, :, None, :]
    input_embed = jnp.concatenate([real, imag], axis=3)       # (B, T, D, 2, K)
    tq_ref = (time_w * q_time + time_b)[:, :, None, None, None]
    tkv_ref = (time_w * kv_time + time_b)[:, :, None, None, None]
    q_ref = input_embed * tq_ref
    kv_ref = input_embed[..., :modes_in] * tkv_ref

    assert q.shape == (B, T, D, 2, K)
    assert kv.shape == (B, T, D, 2, modes_in)
    assert kv2.shape == (B, T, D, 2, modes_in)
    assert jnp.allclose(q, q_ref, rtol=1e-3, atol=1e-3)
    assert jnp.allclose(kv, kv_ref, rtol=1e-3, atol=1e-3)
    assert jnp.allclose(kv2, kv_ref, rtol=1e-3, atol=1e-3)

    print("KERNEL_OK")
</pallas_src>

<mosaic_0001>
module attributes {stable_mosaic.version = 11 : i64} {
  func.func @_embedding_kernel(%arg0: i32, %arg1: memref<4x64xf32, #tpu.memory_space<vmem>>, %arg2: memref<64x96xf32, #tpu.memory_space<vmem>>, %arg3: memref<4x2xf32, #tpu.memory_space<vmem>>, %arg4: memref<4x64xf32, #tpu.memory_space<vmem>>, %arg5: memref<4x32xf32, #tpu.memory_space<vmem>>) attributes {dimension_semantics = [#tpu.dimension_semantics<parallel>], iteration_bounds = array<i64: 1>, scalar_prefetch = 0 : i64, scratch_operands = 0 : i64, tpu.core_type = #tpu.core_type<tc>, window_params = [{transform_indices = @transform_0, window_bounds = array<i64: 4, 64>}, {pipeline_mode = #tpu.pipeline_mode<synchronous>, transform_indices = @transform_1, window_bounds = array<i64: 64, 96>}, {transform_indices = @transform_2, window_bounds = array<i64: 4, 2>}, {transform_indices = @transform_3, window_bounds = array<i64: 4, 64>}, {transform_indices = @transform_4, window_bounds = array<i64: 4, 32>}]} {
    %c0 = arith.constant 0 : index
    %c0_0 = arith.constant 0 : index
    %0 = vector.load %arg1[%c0, %c0_0] : memref<4x64xf32, #tpu.memory_space<vmem>>, vector<4x64xf32>
    %c0_1 = arith.constant 0 : index
    %c0_2 = arith.constant 0 : index
    %1 = vector.load %arg2[%c0_1, %c0_2] : memref<64x96xf32, #tpu.memory_space<vmem>>, vector<64x96xf32>
    %cst = arith.constant dense<0.000000e+00> : vector<4x96xf32>
    %2 = tpu.matmul %0, %1, %cst {dimension_numbers = #tpu.dot_dimension_numbers<[1], [0], [0], [1], [0, 0, 1, 1], [], []>} : vector<4x64xf32>, vector<64x96xf32>, vector<4x96xf32> -> vector<4x96xf32>
    %c0_3 = arith.constant 0 : index
    %c0_4 = arith.constant 0 : index
    %3 = vector.load %arg3[%c0_3, %c0_4] : memref<4x2xf32, #tpu.memory_space<vmem>>, vector<4x2xf32>
    %4 = vector.extract_strided_slice %2 {offsets = [0, 0], sizes = [4, 64], strides = [1, 1]} : vector<4x96xf32> to vector<4x64xf32>
    %5 = vector.extract_strided_slice %3 {offsets = [0, 0], sizes = [4, 1], strides = [1, 1]} : vector<4x2xf32> to vector<4x1xf32>
    %6 = vector.broadcast %5 : vector<4x1xf32> to vector<4x64xf32>
    %7 = arith.mulf %4, %6 : vector<4x64xf32>
    %c0_5 = arith.constant 0 : index
    %c0_6 = arith.constant 0 : index
    %8 = vector.load %arg4[%c0_5, %c0_6] : memref<4x64xf32, #tpu.memory_space<vmem>>, vector<4x64xf32>
    tpu.vector_store %arg4[%c0_5, %c0_6], %7 {strides = array<i32>} : memref<4x64xf32, #tpu.memory_space<vmem>>, vector<4x64xf32>,
    %9 = vector.extract_strided_slice %2 {offsets = [0, 64], sizes = [4, 32], strides = [1, 1]} : vector<4x96xf32> to vector<4x32xf32>
    %10 = vector.extract_strided_slice %3 {offsets = [0, 1], sizes = [4, 1], strides = [1, 1]} : vector<4x2xf32> to vector<4x1xf32>
    %11 = vector.broadcast %10 : vector<4x1xf32> to vector<4x32xf32>
    %12 = arith.mulf %9, %11 : vector<4x32xf32>
    %c0_7 = arith.constant 0 : index
    %c0_8 = arith.constant 0 : index
    %13 = vector.load %arg5[%c0_7, %c0_8] : memref<4x32xf32, #tpu.memory_space<vmem>>, vector<4x32xf32>
    tpu.vector_store %arg5[%c0_7, %c0_8], %12 {strides = array<i32>} : memref<4x32xf32, #tpu.memory_space<vmem>>, vector<4x32xf32>,
    return
  }
  func.func @transform_0(%arg0: i32) -> (i32, i32) {
    %c0_i32 = arith.constant 0 : i32
    %c0_i32_0 = arith.constant 0 : i32
    return %arg0, %c0_i32 : i32, i32
  }
  func.func @transform_1(%arg0: i32) -> (i32, i32) {
    %c0_i32 = arith.constant 0 : i32
    %c0_i32_0 = arith.constant 0 : i32
    %c0_i32_1 = arith.constant 0 : i32
    return %c0_i32, %c0_i32_0 : i32, i32
  }
  func.func @transform_2(%arg0: i32) -> (i32, i32) {
    %c0_i32 = arith.constant 0 : i32
    %c0_i32_0 = arith.constant 0 : i32
    return %arg0, %c0_i32 : i32, i32
  }
  func.func @transform_3(%arg0: i32) -> (i32, i32) {
    %c0_i32 = arith.constant 0 : i32
    %c0_i32_0 = arith.constant 0 : i32
    return %arg0, %c0_i32 : i32, i32
  }
  func.func @transform_4(%arg0: i32) -> (i32, i32) {
    %c0_i32 = arith.constant 0 : i32
    %c0_i32_0 = arith.constant 0 : i32
    return %arg0, %c0_i32 : i32, i32
  }
}

module attributes {stable_mosaic.version = 11 : i64} {
  func.func @_embedding_kernel(%arg0: i32, %arg1: memref<4x64xf32, #tpu.memory_space<vmem>>, %arg2: memref<64x96xf32, #tpu.memory_space<vmem>>, %arg3: memref<4x2xf32, #tpu.memory_space<vmem>>, %arg4: memref<4x64xf32, #tpu.memory_space<vmem>>, %arg5: memref<4x32xf32, #tpu.memory_space<vmem>>) attributes {dimension_semantics = [#tpu.dimension_semantics<parallel>], iteration_bounds = array<i64: 1>, scalar_prefetch = 0 : i64, scratch_operands = 0 : i64, tpu.core_type = #tpu.core_type<tc>, window_params = [{transform_indices = @transform_0, window_bounds = array<i64: 4, 64>}, {pipeline_mode = #tpu.pipeline_mode<synchronous>, transform_indices = @transform_1, window_bounds = array<i64: 64, 96>}, {transform_indices = @transform_2, window_bounds = array<i64: 4, 2>}, {transform_indices = @transform_3, window_bounds = array<i64: 4, 64>}, {transform_indices = @transform_4, window_bounds = array<i64: 4, 32>}]} {
    %c0 = arith.constant 0 : index
    %c0_0 = arith.constant 0 : index
    %0 = vector.load %arg1[%c0, %c0_0] : memref<4x64xf32, #tpu.memory_space<vmem>>, vector<4x64xf32>
    %c0_1 = arith.constant 0 : index
    %c0_2 = arith.constant 0 : index
    %1 = vector.load %arg2[%c0_1, %c0_2] : memref<64x96xf32, #tpu.memory_space<vmem>>, vector<64x96xf32>
    %cst = arith.constant dense<0.000000e+00> : vector<4x96xf32>
    %2 = tpu.matmul %0, %1, %cst {dimension_numbers = #tpu.dot_dimension_numbers<[1], [0], [0], [1], [0, 0, 1, 1], [], []>} : vector<4x64xf32>, vector<64x96xf32>, vector<4x96xf32> -> vector<4x96xf32>
    %c0_3 = arith.constant 0 : index
    %c0_4 = arith.constant 0 : index
    %3 = vector.load %arg3[%c0_3, %c0_4] : memref<4x2xf32, #tpu.memory_space<vmem>>, vector<4x2xf32>
    %4 = vector.extract_strided_slice %2 {offsets = [0, 0], sizes = [4, 64], strides = [1, 1]} : vector<4x96xf32> to vector<4x64xf32>
    %5 = vector.extract_strided_slice %3 {offsets = [0, 0], sizes = [4, 1], strides = [1, 1]} : vector<4x2xf32> to vector<4x1xf32>
    %6 = vector.broadcast %5 : vector<4x1xf32> to vector<4x64xf32>
    %7 = arith.mulf %4, %6 : vector<4x64xf32>
    %c0_5 = arith.constant 0 : index
    %c0_6 = arith.constant 0 : index
    %8 = vector.load %arg4[%c0_5, %c0_6] : memref<4x64xf32, #tpu.memory_space<vmem>>, vector<4x64xf32>
    tpu.vector_store %arg4[%c0_5, %c0_6], %7 {strides = array<i32>} : memref<4x64xf32, #tpu.memory_space<vmem>>, vector<4x64xf32>,
    %9 = vector.extract_strided_slice %2 {offsets = [0, 64], sizes = [4, 32], strides = [1, 1]} : vector<4x96xf32> to vector<4x32xf32>
    %10 = vector.extract_strided_slice %3 {offsets = [0, 1], sizes = [4, 1], strides = [1, 1]} : vector<4x2xf32> to vector<4x1xf32>
    %11 = vector.broadcast %10 : vector<4x1xf32> to vector<4x32xf32>
    %12 = arith.mulf %9, %11 : vector<4x32xf32>
    %c0_7 = arith.constant 0 : index
    %c0_8 = arith.constant 0 : index
    %13 = vector.load %arg5[%c0_7, %c0_8] : memref<4x32xf32, #tpu.memory_space<vmem>>, vector<4x32xf32>
    tpu.vector_store %arg5[%c0_7, %c0_8], %12 {strides = array<i32>} : memref<4x32xf32, #tpu.memory_space<vmem>>, vector<4x32xf32>,
    return
  }
  func.func @transform_0(%arg0: i32) -> (i32, i32) {
    %c0_i32 = arith.constant 0 : i32
    %c0_i32_0 = arith.constant 0 : i32
    return %arg0, %c0_i32 : i32, i32
  }
  func.func @transform_1(%arg0: i32) -> (i32, i32) {
    %c0_i32 = arith.constant 0 : i32
    %c0_i32_0 = arith.constant 0 : i32
    %c0_i32_1 = arith.constant 0 : i32
    return %c0_i32, %c0_i32_0 : i32, i32
  }
  func.func @transform_2(%arg0: i32) -> (i32, i32) {
    %c0_i32 = arith.constant 0 : i32
    %c0_i32_0 = arith.constant 0 : i32
    return %arg0, %c0_i32 : i32, i32
  }
  func.func @transform_3(%arg0: i32) -> (i32, i32) {
    %c0_i32 = arith.constant 0 : i32
    %c0_i32_0 = arith.constant 0 : i32
    return %arg0, %c0_i32 : i32, i32
  }
  func.func @transform_4(%arg0: i32) -> (i32, i32) {
    %c0_i32 = arith.constant 0 : i32
    %c0_i32_0 = arith.constant 0 : i32
    return %arg0, %c0_i32 : i32, i32
  }
}

</mosaic_0001>

<llo_original>
// kernel: tpu_custom_call.1
$region0: #{tpu_custom_call.1}
  #allocation0 [shape = 'u32[]', space=smem, size = 0x4, offset = 0x4, fixed_abs, tag = 'smem constant byte address 0x4 - core index']
  #allocation1 [shape = 'u32[144,128]{1,0:T(1,128)}', space=vmem, size = 0x12000, scoped, tag = 'internal scratch']
  %s0 = inlined_call_operand.vmem [shape: f32[4,64], index: 0, kind: input, shape index: {}]
  %s1 = inlined_call_operand.hbm [shape: f32[64,96], index: 1, kind: input, shape index: {}]
  %s2 = inlined_call_operand.vmem [shape: f32[4,2], index: 2, kind: input, shape index: {}]
  %s3 = inlined_call_operand.hbm [shape: f32[4,64], index: 3, kind: output, shape index: {0}]
  %s4 = inlined_call_operand.hbm [shape: f32[4,32], index: 4, kind: output, shape index: {1}]
  %5 = xla_tuple %s3, %s4
  %s6 = sld [smem:[#allocation0]]
  $region34: #{tpu_custom_call.1} parent=0
    _
  %s8 = ssub.s32 1, %s6
  %s9 = scalar_select 0, %s8, %s6
  $region1: #{tpu_custom_call.1} parent=0
    #allocation2 [shape = 'u8[32768]{0}', space=vmem, size = 0x8000, scoped, tag = 'input window, operand 1, single buffered']
    #allocation3 [shape = 's32[1]{0}', space=sflag, size = 0x4, scoped, tag = 'scoped memory for tpu_custom_call.1']
    #allocation4 [shape = 's32[1]{0}', space=sflag, size = 0x4, scoped, tag = 'scoped memory for tpu_custom_call.1']
    #allocation5 [shape = 'u8[2048]{0}', space=vmem, size = 0x800, scoped, tag = 'output window, operand 0, single buffered']
    #allocation6 [shape = 'u8[2048]{0}', space=vmem, size = 0x800, scoped, tag = 'output window, operand 1, single buffered']
    #allocation7 [shape = 's32[1]{0}', space=sflag, size = 0x4, scoped, tag = 'scoped memory for tpu_custom_call.1']
    %10 = vsyncpa [#allocation3], 0
    %11 = vsyncpa [#allocation4], 0
    %12 = vsyncpa [#allocation7], 0
    // Predicated region
    $region2: #{tpu_custom_call.1} parent=1 // pred_check
      _
    $region3: #{tpu_custom_call.1} parent=1 // pred_check_branch
      %14 = sbr.rel (0) target = $region5
    $region4: #{tpu_custom_call.1} parent=1 // pred_region
      _
    $region5: #{tpu_custom_call.1} parent=1 // pred_fallthru
      _
    // Predicated region
    $region6: #{tpu_custom_call.1} parent=1 // pred_check
      _
    $region7: #{tpu_custom_call.1} parent=1 // pred_check_branch
      %16 = sbr.rel (0) target = $region9
    $region8: #{tpu_custom_call.1} parent=1 // pred_region
      %s18 = ssub.s32 1024, 1024
      %19 = vsyncadd [#allocation3], %s18
      %s20 = sshll.u32 [#allocation2], 4
      %s21 = int_to_ptr.vmem [resolvable:$true] %s20
      %26 = dma.hbm_to_vmem [thread:$0]  %s1, 1024, %s21, [#allocation3], 128, 128, 8
    $region9: #{tpu_custom_call.1} parent=1 // pred_fallthru
      _
    // Predicated region
    $region10: #{tpu_custom_call.1} parent=1 // pred_check
      _
    $region11: #{tpu_custom_call.1} parent=1 // pred_check_branch
      %28 = sbr.rel (0) target = $region13
    $region12: #{tpu_custom_call.1} parent=1 // pred_region
      _
    $region13: #{tpu_custom_call.1} parent=1 // pred_fallthru
      _
    // Predicated region
    $region14: #{tpu_custom_call.1} parent=1 // pred_check
      _
    $region15: #{tpu_custom_call.1} parent=1 // pred_check_branch
      %30 = sbr.rel (0) target = $region17
    $region16: #{tpu_custom_call.1} parent=1 // pred_region
      %31 = dma.done [#allocation3], 1024
    $region17: #{tpu_custom_call.1} parent=1 // pred_fallthru
      _
    %v32 = vld [vmem:[%s0] sm:$0xf]
    %v33 = vld [vmem:[#allocation2] sm:$0xff]
    %v34 = vld [vmem:[#allocation2 + $0x8] sm:$0xff]
    %v35 = vld [vmem:[#allocation2 + $0x10] sm:$0xff]
    %v36 = vld [vmem:[#allocation2 + $0x18] sm:$0xff]
    %v37 = vld [vmem:[#allocation2 + $0x20] sm:$0xff]
    %v38 = vld [vmem:[#allocation2 + $0x28] sm:$0xff]
    %v39 = vld [vmem:[#allocation2 + $0x30] sm:$0xff]
    %v40 = vld [vmem:[#allocation2 + $0x38] sm:$0xff]
    %vm41 = vcmask 523264
    %v43 = vsel %vm41, %v32, 0
    %45 = vmatprep.subr.mxu0 0.0
    %46 = vmatpush1.msra.mxu0 0.0
    %47 = vmatprep.subr.mxu0 0.0
    %48 = vmatpush1.msra.mxu0 0.0
    %49 = vmatprep.subr.mxu0 0.0
    %50 = vmatpush1.msra.mxu0 0.0
    %51 = vmatprep.subr.mxu0 0.0
    %52 = vmatpush1.msra.mxu0 0.0
    %53 = vmatprep.subr.mxu0 0.0
    %54 = vmatpush1.msra.mxu0 0.0
    %55 = vmatprep.subr.mxu0 0.0
    %56 = vmatpush1.msra.mxu0 0.0
    %57 = vmatprep.subr.mxu0 0.0
    %58 = vmatpush1.msra.mxu0 0.0
    %59 = vmatprep.subr.mxu0 0.0
    %60 = vmatpush1.msra.mxu0 0.0
    %61 = vmatprep.subr.mxu0 0.0
    %62 = vmatpush1.msra.mxu0 %v40
    %63 = vmatprep.subr.mxu0 0.0
    %64 = vmatpush1.msra.mxu0 %v39
    %65 = vmatprep.subr.mxu0 0.0
    %66 = vmatpush1.msra.mxu0 %v38
    %67 = vmatprep.subr.mxu0 0.0
    %68 = vmatpush1.msra.mxu0 %v37
    %69 = vmatprep.subr.mxu0 0.0
    %70 = vmatpush1.msra.mxu0 %v36
    %71 = vmatprep.subr.mxu0 0.0
    %72 = vmatpush1.msra.mxu0 %v35
    %73 = vmatprep.subr.mxu0 0.0
    %74 = vmatpush1.msra.mxu0 %v34
    %75 = vmatprep.subr.mxu0 0.0
    %76 = vmatpush1.msra.mxu0 %v33
    %77 = vmatprep.subr.mxu0 0.0
    %78 = vmatpush2.msra.mxu0 0.0
    %79 = vmatprep.subr.mxu0 0.0
    %80 = vmatpush2.msra.mxu0 0.0
    %81 = vmatprep.subr.mxu0 0.0
    %82 = vmatpush2.msra.mxu0 0.0
    %83 = vmatprep.subr.mxu0 0.0
    %84 = vmatpush2.msra.mxu0 0.0
    %85 = vmatprep.subr.mxu0 0.0
    %86 = vmatpush2.msra.mxu0 0.0
    %87 = vmatprep.subr.mxu0 0.0
    %88 = vmatpush2.msra.mxu0 0.0
    %89 = vmatprep.subr.mxu0 0.0
    %90 = vmatpush2.msra.mxu0 0.0
    %91 = vmatprep.subr.mxu0 0.0
    %92 = vmatpush2.msra.mxu0 0.0
    %93 = vmatprep.subr.mxu0 0.0
    %94 = vmatpush2.msra.mxu0 0.0
    %95 = vmatprep.subr.mxu0 0.0
    %96 = vmatpush2.msra.mxu0 0.0
    %97 = vmatprep.subr.mxu0 0.0
    %98 = vmatpush2.msra.mxu0 0.0
    %99 = vmatprep.subr.mxu0 0.0
    %100 = vmatpush2.msra.mxu0 0.0
    %101 = vmatprep.subr.mxu0 0.0
    %102 = vmatpush2.msra.mxu0 0.0
    %103 = vmatprep.subr.mxu0 0.0
    %104 = vmatpush2.msra.mxu0 0.0
    %105 = vmatprep.subr.mxu0 0.0
    %106 = vmatpush2.msra.mxu0 0.0
    %107 = vmatprep.subr.mxu0 0.0
    %108 = vmatpush2.msra.mxu0 0.0
    %109 = vmatprep.mubr.f32.mxu0 0.0
    %110 = vmatmul.mubr.f32.gmra.mxu0 %v43
    %v111 = vpop.f32.mrf.mxu0
    %v112 = vadd.f32 0.0, %v111
    %v113 = vpop.f32.mrf.mxu0
    %114 = vdwg.mxu0
    %v115 = vld [vmem:[%s2] sm:$0xf]
    %117 = vset.pattern.permute.xlu0 0
    %118 = vperm.xlu0 %117, %v115
    %v119 = vpop.permute.xlu0 %118
    %v121 = vmul.f32 %v112, %v119
    %vm122 = vcmask 519168
    %123 = vst.msk [vmem:[#allocation5] sm:$0xf] %vm122, %v121
    %124 = vset.pattern.permute.xlu0 1
    %125 = vperm.xlu0 %124, %v115
    %v126 = vpop.permute.xlu0 %125
    %v128 = vmul.f32 %v112, %v126
    %130 = vrot.lane.b32.xlu0 %v128, 64
    %v131 = vpop.permute.xlu0 %130
    %vm133 = vcmask 257024
    %134 = vst.msk [vmem:[#allocation6] sm:$0xf] %vm133, %v131
    // Predicated region
    $region18: #{tpu_custom_call.1} parent=1 // pred_check
      _
    $region19: #{tpu_custom_call.1} parent=1 // pred_check_branch
      %136 = sbr.rel (0) target = $region21
    $region20: #{tpu_custom_call.1} parent=1 // pred_region
      %s138 = ssub.s32 64, 64
      %139 = vsyncadd [#allocation4], %s138
      %s141 = sshll.u32 [#allocation5], 4
      %s142 = int_to_ptr.vmem [resolvable:$true] %s141
      %144 = dma.vmem_to_hbm [thread:$0]  %s142, 64, %s3, [#allocation4]
    $region21: #{tpu_custom_call.1} parent=1 // pred_fallthru
      _
    // Predicated region
    $region22: #{tpu_custom_call.1} parent=1 // pred_check
      _
    $region23: #{tpu_custom_call.1} parent=1 // pred_check_branch
      %146 = sbr.rel (0) target = $region25
    $region24: #{tpu_custom_call.1} parent=1 // pred_region
      %s148 = ssub.s32 64, 64
      %149 = vsyncadd [#allocation7], %s148
      %s151 = sshll.u32 [#allocation6], 4
      %s152 = int_to_ptr.vmem [resolvable:$true] %s151
      %154 = dma.vmem_to_hbm [thread:$0]  %s152, 64, %s4, [#allocation7]
    $region25: #{tpu_custom_call.1} parent=1 // pred_fallthru
      _
    // Predicated region
    $region26: #{tpu_custom_call.1} parent=1 // pred_check
      _
    $region27: #{tpu_custom_call.1} parent=1 // pred_check_branch
      %156 = sbr.rel (0) target = $region29
    $region28: #{tpu_custom_call.1} parent=1 // pred_region
      %157 = dma.done [#allocation4], 64
    $region29: #{tpu_custom_call.1} parent=1 // pred_fallthru
      _
    // Predicated region
    $region30: #{tpu_custom_call.1} parent=1 // pred_check
      _
    $region31: #{tpu_custom_call.1} parent=1 // pred_check_branch
      %159 = sbr.rel (0) target = $region33
    $region32: #{tpu_custom_call.1} parent=1 // pred_region
      %160 = dma.done [#allocation7], 64
    $region33: #{tpu_custom_call.1} parent=1 // pred_fallthru
      _
    %161 = vsyncpa [#allocation3], 1
    %162 = vsyncpa [#allocation4], 1
    %163 = vsyncpa [#allocation7], 1

// kernel: tpu_custom_call.1
$region0: #{tpu_custom_call.1}
  #allocation0 [shape = 'u32[]', space=smem, size = 0x4, offset = 0x4, fixed_abs, tag = 'smem constant byte address 0x4 - core index']
  #allocation1 [shape = 'u32[144,128]{1,0:T(1,128)}', space=vmem, size = 0x12000, scoped, tag = 'internal scratch']
  %s0 = inlined_call_operand.vmem [shape: f32[4,64], index: 0, kind: input, shape index: {}]
  %s1 = inlined_call_operand.hbm [shape: f32[64,96], index: 1, kind: input, shape index: {}]
  %s2 = inlined_call_operand.vmem [shape: f32[4,2], index: 2, kind: input, shape index: {}]
  %s3 = inlined_call_operand.hbm [shape: f32[4,64], index: 3, kind: output, shape index: {0}]
  %s4 = inlined_call_operand.hbm [shape: f32[4,32], index: 4, kind: output, shape index: {1}]
  %5 = xla_tuple %s3, %s4
  %s6 = sld [smem:[#allocation0]]
  $region34: #{tpu_custom_call.1} parent=0
    _
  %s8 = ssub.s32 1, %s6
  %s9 = scalar_select 0, %s8, %s6
  $region1: #{tpu_custom_call.1} parent=0
    #allocation2 [shape = 'u8[32768]{0}', space=vmem, size = 0x8000, scoped, tag = 'input window, operand 1, single buffered']
    #allocation3 [shape = 's32[1]{0}', space=sflag, size = 0x4, scoped, tag = 'scoped memory for tpu_custom_call.1']
    #allocation4 [shape = 's32[1]{0}', space=sflag, size = 0x4, scoped, tag = 'scoped memory for tpu_custom_call.1']
    #allocation5 [shape = 'u8[2048]{0}', space=vmem, size = 0x800, scoped, tag = 'output window, operand 0, single buffered']
    #allocation6 [shape = 'u8[2048]{0}', space=vmem, size = 0x800, scoped, tag = 'output window, operand 1, single buffered']
    #allocation7 [shape = 's32[1]{0}', space=sflag, size = 0x4, scoped, tag = 'scoped memory for tpu_custom_call.1']
    %10 = vsyncpa [#allocation3], 0
    %11 = vsyncpa [#allocation4], 0
    %12 = vsyncpa [#allocation7], 0
    // Predicated region
    $region2: #{tpu_custom_call.1} parent=1 // pred_check
      _
    $region3: #{tpu_custom_call.1} parent=1 // pred_check_branch
      %14 = sbr.rel (0) target = $region5
    $region4: #{tpu_custom_call.1} parent=1 // pred_region
      _
    $region5: #{tpu_custom_call.1} parent=1 // pred_fallthru
      _
    // Predicated region
    $region6: #{tpu_custom_call.1} parent=1 // pred_check
      _
    $region7: #{tpu_custom_call.1} parent=1 // pred_check_branch
      %16 = sbr.rel (0) target = $region9
    $region8: #{tpu_custom_call.1} parent=1 // pred_region
      %s18 = ssub.s32 1024, 1024
      %19 = vsyncadd [#allocation3], %s18
      %s20 = sshll.u32 [#allocation2], 4
      %s21 = int_to_ptr.vmem [resolvable:$true] %s20
      %26 = dma.hbm_to_vmem [thread:$0]  %s1, 1024, %s21, [#allocation3], 128, 128, 8
    $region9: #{tpu_custom_call.1} parent=1 // pred_fallthru
      _
    // Predicated region
    $region10: #{tpu_custom_call.1} parent=1 // pred_check
      _
    $region11: #{tpu_custom_call.1} parent=1 // pred_check_branch
      %28 = sbr.rel (0) target = $region13
    $region12: #{tpu_custom_call.1} parent=1 // pred_region
      _
    $region13: #{tpu_custom_call.1} parent=1 // pred_fallthru
      _
    // Predicated region
    $region14: #{tpu_custom_call.1} parent=1 // pred_check
      _
    $region15: #{tpu_custom_call.1} parent=1 // pred_check_branch
      %30 = sbr.rel (0) target = $region17
    $region16: #{tpu_custom_call.1} parent=1 // pred_region
      %31 = dma.done [#allocation3], 1024
    $region17: #{tpu_custom_call.1} parent=1 // pred_fallthru
      _
    %v32 = vld [vmem:[%s0] sm:$0xf]
    %v33 = vld [vmem:[#allocation2] sm:$0xff]
    %v34 = vld [vmem:[#allocation2 + $0x8] sm:$0xff]
    %v35 = vld [vmem:[#allocation2 + $0x10] sm:$0xff]
    %v36 = vld [vmem:[#allocation2 + $0x18] sm:$0xff]
    %v37 = vld [vmem:[#allocation2 + $0x20] sm:$0xff]
    %v38 = vld [vmem:[#allocation2 + $0x28] sm:$0xff]
    %v39 = vld [vmem:[#allocation2 + $0x30] sm:$0xff]
    %v40 = vld [vmem:[#allocation2 + $0x38] sm:$0xff]
    %vm41 = vcmask 523264
    %v43 = vsel %vm41, %v32, 0
    %45 = vmatprep.subr.mxu0 0.0
    %46 = vmatpush1.msra.mxu0 0.0
    %47 = vmatprep.subr.mxu0 0.0
    %48 = vmatpush1.msra.mxu0 0.0
    %49 = vmatprep.subr.mxu0 0.0
    %50 = vmatpush1.msra.mxu0 0.0
    %51 = vmatprep.subr.mxu0 0.0
    %52 = vmatpush1.msra.mxu0 0.0
    %53 = vmatprep.subr.mxu0 0.0
    %54 = vmatpush1.msra.mxu0 0.0
    %55 = vmatprep.subr.mxu0 0.0
    %56 = vmatpush1.msra.mxu0 0.0
    %57 = vmatprep.subr.mxu0 0.0
    %58 = vmatpush1.msra.mxu0 0.0
    %59 = vmatprep.subr.mxu0 0.0
    %60 = vmatpush1.msra.mxu0 0.0
    %61 = vmatprep.subr.mxu0 0.0
    %62 = vmatpush1.msra.mxu0 %v40
    %63 = vmatprep.subr.mxu0 0.0
    %64 = vmatpush1.msra.mxu0 %v39
    %65 = vmatprep.subr.mxu0 0.0
    %66 = vmatpush1.msra.mxu0 %v38
    %67 = vmatprep.subr.mxu0 0.0
    %68 = vmatpush1.msra.mxu0 %v37
    %69 = vmatprep.subr.mxu0 0.0
    %70 = vmatpush1.msra.mxu0 %v36
    %71 = vmatprep.subr.mxu0 0.0
    %72 = vmatpush1.msra.mxu0 %v35
    %73 = vmatprep.subr.mxu0 0.0
    %74 = vmatpush1.msra.mxu0 %v34
    %75 = vmatprep.subr.mxu0 0.0
    %76 = vmatpush1.msra.mxu0 %v33
    %77 = vmatprep.subr.mxu0 0.0
    %78 = vmatpush2.msra.mxu0 0.0
    %79 = vmatprep.subr.mxu0 0.0
    %80 = vmatpush2.msra.mxu0 0.0
    %81 = vmatprep.subr.mxu0 0.0
    %82 = vmatpush2.msra.mxu0 0.0
    %83 = vmatprep.subr.mxu0 0.0
    %84 = vmatpush2.msra.mxu0 0.0
    %85 = vmatprep.subr.mxu0 0.0
    %86 = vmatpush2.msra.mxu0 0.0
    %87 = vmatprep.subr.mxu0 0.0
    %88 = vmatpush2.msra.mxu0 0.0
    %89 = vmatprep.subr.mxu0 0.0
    %90 = vmatpush2.msra.mxu0 0.0
    %91 = vmatprep.subr.mxu0 0.0
    %92 = vmatpush2.msra.mxu0 0.0
    %93 = vmatprep.subr.mxu0 0.0
    %94 = vmatpush2.msra.mxu0 0.0
    %95 = vmatprep.subr.mxu0 0.0
    %96 = vmatpush2.msra.mxu0 0.0
    %97 = vmatprep.subr.mxu0 0.0
    %98 = vmatpush2.msra.mxu0 0.0
    %99 = vmatprep.subr.mxu0 0.0
    %100 = vmatpush2.msra.mxu0 0.0
    %101 = vmatprep.subr.mxu0 0.0
    %102 = vmatpush2.msra.mxu0 0.0
    %103 = vmatprep.subr.mxu0 0.0
    %104 = vmatpush2.msra.mxu0 0.0
    %105 = vmatprep.subr.mxu0 0.0
    %106 = vmatpush2.msra.mxu0 0.0
    %107 = vmatprep.subr.mxu0 0.0
    %108 = vmatpush2.msra.mxu0 0.0
    %109 = vmatprep.mubr.f32.mxu0 0.0
    %110 = vmatmul.mubr.f32.gmra.mxu0 %v43
    %v111 = vpop.f32.mrf.mxu0
    %v112 = vadd.f32 0.0, %v111
    %v113 = vpop.f32.mrf.mxu0
    %114 = vdwg.mxu0
    %v115 = vld [vmem:[%s2] sm:$0xf]
    %117 = vset.pattern.permute.xlu0 0
    %118 = vperm.xlu0 %117, %v115
    %v119 = vpop.permute.xlu0 %118
    %v121 = vmul.f32 %v112, %v119
    %vm122 = vcmask 519168
    %123 = vst.msk [vmem:[#allocation5] sm:$0xf] %vm122, %v121
    %124 = vset.pattern.permute.xlu0 1
    %125 = vperm.xlu0 %124, %v115
    %v126 = vpop.permute.xlu0 %125
    %v128 = vmul.f32 %v112, %v126
    %130 = vrot.lane.b32.xlu0 %v128, 64
    %v131 = vpop.permute.xlu0 %130
    %vm133 = vcmask 257024
    %134 = vst.msk [vmem:[#allocation6] sm:$0xf] %vm133, %v131
    // Predicated region
    $region18: #{tpu_custom_call.1} parent=1 // pred_check
      _
    $region19: #{tpu_custom_call.1} parent=1 // pred_check_branch
      %136 = sbr.rel (0) target = $region21
    $region20: #{tpu_custom_call.1} parent=1 // pred_region
      %s138 = ssub.s32 64, 64
      %139 = vsyncadd [#allocation4], %s138
      %s141 = sshll.u32 [#allocation5], 4
      %s142 = int_to_ptr.vmem [resolvable:$true] %s141
      %144 = dma.vmem_to_hbm [thread:$0]  %s142, 64, %s3, [#allocation4]
    $region21: #{tpu_custom_call.1} parent=1 // pred_fallthru
      _
    // Predicated region
    $region22: #{tpu_custom_call.1} parent=1 // pred_check
      _
    $region23: #{tpu_custom_call.1} parent=1 // pred_check_branch
      %146 = sbr.rel (0) target = $region25
    $region24: #{tpu_custom_call.1} parent=1 // pred_region
      %s148 = ssub.s32 64, 64
      %149 = vsyncadd [#allocation7], %s148
      %s151 = sshll.u32 [#allocation6], 4
      %s152 = int_to_ptr.vmem [resolvable:$true] %s151
      %154 = dma.vmem_to_hbm [thread:$0]  %s152, 64, %s4, [#allocation7]
    $region25: #{tpu_custom_call.1} parent=1 // pred_fallthru
      _
    // Predicated region
    $region26: #{tpu_custom_call.1} parent=1 // pred_check
      _
    $region27: #{tpu_custom_call.1} parent=1 // pred_check_branch
      %156 = sbr.rel (0) target = $region29
    $region28: #{tpu_custom_call.1} parent=1 // pred_region
      %157 = dma.done [#allocation4], 64
    $region29: #{tpu_custom_call.1} parent=1 // pred_fallthru
      _
    // Predicated region
    $region30: #{tpu_custom_call.1} parent=1 // pred_check
      _
    $region31: #{tpu_custom_call.1} parent=1 // pred_check_branch
      %159 = sbr.rel (0) target = $region33
    $region32: #{tpu_custom_call.1} parent=1 // pred_region
      %160 = dma.done [#allocation7], 64
    $region33: #{tpu_custom_call.1} parent=1 // pred_fallthru
      _
    %161 = vsyncpa [#allocation3], 1
    %162 = vsyncpa [#allocation4], 1
    %163 = vsyncpa [#allocation7], 1

</llo_original>
